<compile_context>
chip_gen: v7x
topology: tpu7x:2x2x1
jax: 0.10.0
libtpu: 0.0.40
codegen_flags: <defaults>
</compile_context>

<pallas_src>
import math

import jax
import jax.numpy as jnp
from jax.experimental import pallas as pl
from jax.experimental.pallas import tpu as pltpu

LANES = 128


def _occlusion_kernel(thr_ref, x_ref, o_ref):
    x = x_ref[...]
    # Matches PyTorch tensor <= python-float promotion: compare in the tensor dtype.
    thr = thr_ref[0].astype(x.dtype)
    o_ref[...] = jnp.where(x <= thr, jnp.zeros_like(x), x)


def _sublane_multiple(dtype):
    # 8 for f32, 16 for bf16, 32 for int8/fp8 (sub-32-bit packs along sublanes).
    itemsize = jnp.dtype(dtype).itemsize
    return max(8, 32 // itemsize)


def _round_up(a, b):
    return -(-a // b) * b


def _default_budget():
    """Per-TPU-generation (target_block_bytes, vmem_limit_bytes)."""
    try:
        kind = jax.devices()[0].device_kind.lower()
    except Exception:
        kind = ""
    if "v7" in kind or "tpu7" in kind:       # 64 MiB VMEM/TC, ~3.2 TB/s HBM
        return 6 << 20, 48 << 20
    if "v6" in kind or "tpu6" in kind:       # 128 MiB VMEM, ~1.4 TB/s HBM
        return 8 << 20, 64 << 20
    if "v5" in kind or "v4" in kind:         # raise the small scoped-VMEM default
        return 4 << 20, 48 << 20
    return 2 << 20, None                     # v2/v3/unknown: stay under defaults


def _choose_2d_view(shape, n):
    """Pick a (rows, width) factorization of n reachable by a free (bitcast) reshape."""
    if n % LANES == 0:
        # Lane-dense synthetic widths: unmasked full-line stores, contiguous DMAs.
        for w in (2048, 1024, 512, 256, LANES):
            if n % w == 0 and (n // w) >= 8:
                return n // w, w
        return n // LANES, LANES
    # Not 128-divisible: merge trailing dims until width >= 128 so the masked final
    # lane-tile is a bounded fraction of each row.  Still zero-copy.
    width = 1
    for d in reversed(shape):
        width *= int(d)
        if width >= LANES:
            break
    return n // width, width


def _run_tiled(slab, thr_arr, *, target_block_bytes, vmem_limit_bytes):
    rows, width = slab.shape
    dtype = slab.dtype
    itemsize = jnp.dtype(dtype).itemsize
    sub = _sublane_multiple(dtype)

    padded_width = _round_up(width, LANES)

    # Lane (column) tiling only when even a minimal-row, full-width block busts the
    # VMEM block budget (budget accounts for sublane/lane padding of the VMEM layout).
    if padded_width * sub * itemsize <= target_block_bytes:
        tc = width                               # full dim: always a legal block extent
    else:
        tc = max(LANES, (target_block_bytes // (sub * itemsize)) // LANES * LANES)
        if tc >= width:
            tc = width
    c_blocks = pl.cdiv(width, tc)
    block_w_padded = _round_up(tc, LANES)

    # Row tiling: multiple of the sublane pack; ragged final block handled by the grid.
    tr_budget = max(sub, (target_block_bytes // (block_w_padded * itemsize)) // sub * sub)
    tr = rows if tr_budget >= rows else tr_budget
    r_blocks = pl.cdiv(rows, tr)

    n_elem = rows * width
    cost = pl.CostEstimate(
        flops=n_elem, transcendentals=0, bytes_accessed=2 * n_elem * itemsize
    )

    params = dict(dimension_semantics=("parallel", "parallel"))
    if vmem_limit_bytes is not None:
        params["vmem_limit_bytes"] = int(vmem_limit_bytes)

    return pl.pallas_call(
        _occlusion_kernel,
        out_shape=jax.ShapeDtypeStruct((rows, width), dtype),
        grid=(r_blocks, c_blocks),
        in_specs=[
            pl.BlockSpec(memory_space=pltpu.MemorySpace.SMEM),   # threshold (1,) f32
            pl.BlockSpec((tr, tc), lambda i, j: (i, j)),
        ],
        out_specs=pl.BlockSpec((tr, tc), lambda i, j: (i, j)),
        compiler_params=pltpu.CompilerParams(**params),
        cost_estimate=cost,
    )(thr_arr, slab)


def occlusion_aware_similarity(similarity_matrix, threshold, *,
                               target_block_bytes=None, vmem_limit_bytes=None,
                               small_input_bytes=256 * 1024):
    """Elementwise: zero out entries <= threshold.  Works for any input shape."""
    x = similarity_matrix
    orig_shape = x.shape
    dtype = x.dtype
    itemsize = jnp.dtype(dtype).itemsize

    n = math.prod(orig_shape) if len(orig_shape) > 0 else 1
    if n == 0:
        return x

    # Tiny-input bypass: pallas_call launch overhead > a fused XLA elementwise op.
    if n * itemsize <= small_input_bytes:
        thr = jnp.asarray(threshold, dtype=jnp.float32).astype(dtype)
        return jnp.where(x <= thr, jnp.zeros_like(x), x)

    if target_block_bytes is None or vmem_limit_bytes is None:
        tb, vl = _default_budget()
        if target_block_bytes is None:
            target_block_bytes = tb
        if vmem_limit_bytes is None:
            vmem_limit_bytes = vl

    thr_arr = jnp.asarray(threshold, dtype=jnp.float32).reshape((1,))

    rows, width = _choose_2d_view(orig_shape, n)
    slab = x.reshape(rows, width)            # contiguous reshape: bitcast, no copy
    out = _run_tiled(slab, thr_arr,
                     target_block_bytes=target_block_bytes,
                     vmem_limit_bytes=vmem_limit_bytes)
    return out.reshape(orig_shape)


def _reference(x, threshold):
    thr = jnp.asarray(threshold, jnp.float32).astype(x.dtype)
    return jnp.where(x <= thr, jnp.zeros_like(x), x)


if __name__ == "__main__":
    key = jax.random.PRNGKey(0)
    threshold = 0.2
    keys = jax.random.split(key, 5)

    # 1) Module-sized small input (2,4,16,16): tiny-input bypass path.
    x1 = jax.random.uniform(keys[0], (2, 4, 16, 16), dtype=jnp.float32,
                            minval=-1.0, maxval=1.0)
    out1 = jax.block_until_ready(occlusion_aware_similarity(x1, threshold))
    assert out1.shape == x1.shape and out1.dtype == x1.dtype
    assert bool(jnp.array_equal(out1, _reference(x1, threshold)))

    # 2) Lane-dense Pallas path (free reshape to a 128-multiple width).
    x2 = jax.random.uniform(keys[1], (256, 384), dtype=jnp.float32,
                            minval=-1.0, maxval=1.0)
    out2 = jax.block_until_ready(occlusion_aware_similarity(x2, threshold))
    assert bool(jnp.array_equal(out2, _reference(x2, threshold)))

    # 3) General path: non-128 width used as full-dim lane extent, ragged row blocks
    #    (small block budget forces a multi-step grid).  No pad / slice copies.
    x3 = jax.random.uniform(keys[2], (523, 259), dtype=jnp.float32,
                            minval=-1.0, maxval=1.0)
    out3 = jax.block_until_ready(
        occlusion_aware_similarity(x3, threshold, target_block_bytes=64 * 1024))
    assert bool(jnp.array_equal(out3, _reference(x3, threshold)))

    # 4) bf16 input (sublane pack of 16), lane-dense path.
    x4 = jax.random.uniform(keys[3], (512, 384), dtype=jnp.bfloat16,
                            minval=-1.0, maxval=1.0)
    out4 = jax.block_until_ready(occlusion_aware_similarity(x4, threshold))
    assert out4.dtype == jnp.bfloat16
    assert bool(jnp.array_equal(out4, _reference(x4, threshold)))

    # 5) Wide-row lane-tiling path exercised directly (column grid > 1).
    x5 = jax.random.uniform(keys[4], (8, 65536), dtype=jnp.float32,
                            minval=-1.0, maxval=1.0)
    thr_arr = jnp.asarray(threshold, dtype=jnp.float32).reshape((1,))
    out5 = jax.block_until_ready(
        _run_tiled(x5, thr_arr, target_block_bytes=1 << 20, vmem_limit_bytes=None))
    assert bool(jnp.array_equal(out5, _reference(x5, threshold)))

    print("KERNEL_OK")
</pallas_src>

<mosaic_0001>
module attributes {stable_mosaic.version = 11 : i64} {
  func.func @_occlusion_kernel(%arg0: i32, %arg1: i32, %arg2: memref<1xf32, #tpu.memory_space<smem>>, %arg3: memref<48x2048xf32, #tpu.memory_space<vmem>>, %arg4: memref<48x2048xf32, #tpu.memory_space<vmem>>) attributes {dimension_semantics = [#tpu.dimension_semantics<parallel>, #tpu.dimension_semantics<parallel>], iteration_bounds = array<i64: 1, 1>, scalar_prefetch = 0 : i64, scratch_operands = 0 : i64, tpu.core_type = #tpu.core_type<tc>, window_params = [{transform_indices = @transform_0, window_bounds = array<i64: 1>}, {transform_indices = @transform_1, window_bounds = array<i64: 48, 2048>}, {transform_indices = @transform_2, window_bounds = array<i64: 48, 2048>}]} {
    %c0 = arith.constant 0 : index
    %c0_0 = arith.constant 0 : index
    %0 = vector.load %arg3[%c0, %c0_0] : memref<48x2048xf32, #tpu.memory_space<vmem>>, vector<48x2048xf32>
    %c0_1 = arith.constant 0 : index
    %1 = memref.load %arg2[%c0_1] : memref<1xf32, #tpu.memory_space<smem>>
    %2 = vector.broadcast %1 : f32 to vector<48x2048xf32>
    %3 = arith.cmpf ole, %0, %2 : vector<48x2048xf32>
    %cst = arith.constant 0.000000e+00 : f32
    %4 = vector.broadcast %cst : f32 to vector<48x2048xf32>
    %5 = arith.select %3, %4, %0 : vector<48x2048xi1>, vector<48x2048xf32>
    %c0_2 = arith.constant 0 : index
    %c0_3 = arith.constant 0 : index
    %6 = vector.load %arg4[%c0_2, %c0_3] : memref<48x2048xf32, #tpu.memory_space<vmem>>, vector<48x2048xf32>
    tpu.vector_store %arg4[%c0_2, %c0_3], %5 {strides = array<i32>} : memref<48x2048xf32, #tpu.memory_space<vmem>>, vector<48x2048xf32>,
    return
  }
  func.func @transform_0(%arg0: i32, %arg1: i32) -> i32 {
    %c0_i32 = arith.constant 0 : i32
    %c0_i32_0 = arith.constant 0 : i32
    return %c0_i32 : i32
  }
  func.func @transform_1(%arg0: i32, %arg1: i32) -> (i32, i32) {
    %c0_i32 = arith.constant 0 : i32
    return %arg0, %arg1 : i32, i32
  }
  func.func @transform_2(%arg0: i32, %arg1: i32) -> (i32, i32) {
    %c0_i32 = arith.constant 0 : i32
    return %arg0, %arg1 : i32, i32
  }
}

</mosaic_0001>

<llo_original>
// kernel: tpu_custom_call.1
$region0: #{tpu_custom_call.1}
  #allocation0 [shape = 'u32[]', space=smem, size = 0x4, offset = 0x4, fixed_abs, tag = 'smem constant byte address 0x4 - core index']
  #allocation1 [shape = 'u32[144,128]{1,0:T(1,128)}', space=vmem, size = 0x12000, scoped, tag = 'internal scratch']
  #allocation2 [shape = 'f32[1]{0:T(128)S(6)}', space=smem, size = 0x200, scoped, tag = 'scoped memory for tpu_custom_call.1']
  %s0 = inlined_call_operand.<no memory space> [shape: f32[1], index: 0, kind: input, shape index: {}]
  %s1 = inlined_call_operand.hbm [shape: f32[48,2048], index: 1, kind: input, shape index: {}]
  %s2 = inlined_call_operand.hbm [shape: f32[48,2048], index: 2, kind: output, shape index: {}]
  %s3 = sld [smem:[#allocation0]]
  $region22: #{tpu_custom_call.1} parent=0
    _
  %s5 = ssub.s32 1, %s3
  %s6 = scalar_select 0, %s5, %s3
  %7 = sst [smem:[#allocation2]] %s0
  $region1: #{tpu_custom_call.1} parent=0
    #allocation3 [shape = 'u8[393216]{0}', space=vmem, size = 0x60000, scoped, tag = 'input window, operand 1, single buffered']
    #allocation4 [shape = 's32[1]{0}', space=sflag, size = 0x4, scoped, tag = 'scoped memory for tpu_custom_call.1']
    #allocation5 [shape = 's32[1]{0}', space=sflag, size = 0x4, scoped, tag = 'scoped memory for tpu_custom_call.1']
    #allocation6 [shape = 'u8[393216]{0}', space=vmem, size = 0x60000, scoped, tag = 'output window, operand 0, single buffered']
    %8 = vsyncpa [#allocation4], 0
    %9 = vsyncpa [#allocation5], 0
    // Predicated region
    $region2: #{tpu_custom_call.1} parent=1 // pred_check
      _
    $region3: #{tpu_custom_call.1} parent=1 // pred_check_branch
      %11 = sbr.rel (0) target = $region5
    $region4: #{tpu_custom_call.1} parent=1 // pred_region
      _
    $region5: #{tpu_custom_call.1} parent=1 // pred_fallthru
      _
    // Predicated region
    $region6: #{tpu_custom_call.1} parent=1 // pred_check
      _
    $region7: #{tpu_custom_call.1} parent=1 // pred_check_branch
      %13 = sbr.rel (0) target = $region9
    $region8: #{tpu_custom_call.1} parent=1 // pred_region
      %s15 = ssub.s32 12288, 12288
      %16 = vsyncadd [#allocation4], %s15
      %s17 = sshll.u32 [#allocation3], 4
      %s18 = int_to_ptr.vmem [resolvable:$true] %s17
      %23 = dma.hbm_to_vmem [thread:$0]  %s1, 12288, %s18, [#allocation4], 2048, 2048, 128
    $region9: #{tpu_custom_call.1} parent=1 // pred_fallthru
      _
    // Predicated region
    $region10: #{tpu_custom_call.1} parent=1 // pred_check
      _
    $region11: #{tpu_custom_call.1} parent=1 // pred_check_branch
      %25 = sbr.rel (0) target = $region13
    $region12: #{tpu_custom_call.1} parent=1 // pred_region
      %26 = dma.done [#allocation4], 12288
    $region13: #{tpu_custom_call.1} parent=1 // pred_fallthru
      _
    %v27 = vld [vmem:[#allocation3] sm:$0xff]
    %v28 = vld [vmem:[#allocation3 + $0x8] sm:$0xff]
    %v29 = vld [vmem:[#allocation3 + $0x10] sm:$0xff]
    %v30 = vld [vmem:[#allocation3 + $0x18] sm:$0xff]
    %v31 = vld [vmem:[#allocation3 + $0x20] sm:$0xff]
    %v32 = vld [vmem:[#allocation3 + $0x28] sm:$0xff]
    %v33 = vld [vmem:[#allocation3 + $0x30] sm:$0xff]
    %v34 = vld [vmem:[#allocation3 + $0x38] sm:$0xff]
    %v35 = vld [vmem:[#allocation3 + $0x40] sm:$0xff]
    %v36 = vld [vmem:[#allocation3 + $0x48] sm:$0xff]
    %v37 = vld [vmem:[#allocation3 + $0x50] sm:$0xff]
    %v38 = vld [vmem:[#allocation3 + $0x58] sm:$0xff]
    %v39 = vld [vmem:[#allocation3 + $0x60] sm:$0xff]
    %v40 = vld [vmem:[#allocation3 + $0x68] sm:$0xff]
    %v41 = vld [vmem:[#allocation3 + $0x70] sm:$0xff]
    %v42 = vld [vmem:[#allocation3 + $0x78] sm:$0xff]
    %v43 = vld [vmem:[#allocation3 + $0x80] sm:$0xff]
    %v44 = vld [vmem:[#allocation3 + $0x88] sm:$0xff]
    %v45 = vld [vmem:[#allocation3 + $0x90] sm:$0xff]
    %v46 = vld [vmem:[#allocation3 + $0x98] sm:$0xff]
    %v47 = vld [vmem:[#allocation3 + $0xa0] sm:$0xff]
    %v48 = vld [vmem:[#allocation3 + $0xa8] sm:$0xff]
    %v49 = vld [vmem:[#allocation3 + $0xb0] sm:$0xff]
    %v50 = vld [vmem:[#allocation3 + $0xb8] sm:$0xff]
    %v51 = vld [vmem:[#allocation3 + $0xc0] sm:$0xff]
    %v52 = vld [vmem:[#allocation3 + $0xc8] sm:$0xff]
    %v53 = vld [vmem:[#allocation3 + $0xd0] sm:$0xff]
    %v54 = vld [vmem:[#allocation3 + $0xd8] sm:$0xff]
    %v55 = vld [vmem:[#allocation3 + $0xe0] sm:$0xff]
    %v56 = vld [vmem:[#allocation3 + $0xe8] sm:$0xff]
    %v57 = vld [vmem:[#allocation3 + $0xf0] sm:$0xff]
    %v58 = vld [vmem:[#allocation3 + $0xf8] sm:$0xff]
    %v59 = vld [vmem:[#allocation3 + $0x100] sm:$0xff]
    %v60 = vld [vmem:[#allocation3 + $0x108] sm:$0xff]
    %v61 = vld [vmem:[#allocation3 + $0x110] sm:$0xff]
    %v62 = vld [vmem:[#allocation3 + $0x118] sm:$0xff]
    %v63 = vld [vmem:[#allocation3 + $0x120] sm:$0xff]
    %v64 = vld [vmem:[#allocation3 + $0x128] sm:$0xff]
    %v65 = vld [vmem:[#allocation3 + $0x130] sm:$0xff]
    %v66 = vld [vmem:[#allocation3 + $0x138] sm:$0xff]
    %v67 = vld [vmem:[#allocation3 + $0x140] sm:$0xff]
    %v68 = vld [vmem:[#allocation3 + $0x148] sm:$0xff]
    %v69 = vld [vmem:[#allocation3 + $0x150] sm:$0xff]
    %v70 = vld [vmem:[#allocation3 + $0x158] sm:$0xff]
    %v71 = vld [vmem:[#allocation3 + $0x160] sm:$0xff]
    %v72 = vld [vmem:[#allocation3 + $0x168] sm:$0xff]
    %v73 = vld [vmem:[#allocation3 + $0x170] sm:$0xff]
    %v74 = vld [vmem:[#allocation3 + $0x178] sm:$0xff]
    %v75 = vld [vmem:[#allocation3 + $0x180] sm:$0xff]
    %v76 = vld [vmem:[#allocation3 + $0x188] sm:$0xff]
    %v77 = vld [vmem:[#allocation3 + $0x190] sm:$0xff]
    %v78 = vld [vmem:[#allocation3 + $0x198] sm:$0xff]
    %v79 = vld [vmem:[#allocation3 + $0x1a0] sm:$0xff]
    %v80 = vld [vmem:[#allocation3 + $0x1a8] sm:$0xff]
    %v81 = vld [vmem:[#allocation3 + $0x1b0] sm:$0xff]
    %v82 = vld [vmem:[#allocation3 + $0x1b8] sm:$0xff]
    %v83 = vld [vmem:[#allocation3 + $0x1c0] sm:$0xff]
    %v84 = vld [vmem:[#allocation3 + $0x1c8] sm:$0xff]
    %v85 = vld [vmem:[#allocation3 + $0x1d0] sm:$0xff]
    %v86 = vld [vmem:[#allocation3 + $0x1d8] sm:$0xff]
    %v87 = vld [vmem:[#allocation3 + $0x1e0] sm:$0xff]
    %v88 = vld [vmem:[#allocation3 + $0x1e8] sm:$0xff]
    %v89 = vld [vmem:[#allocation3 + $0x1f0] sm:$0xff]
    %v90 = vld [vmem:[#allocation3 + $0x1f8] sm:$0xff]
    %v91 = vld [vmem:[#allocation3 + $0x200] sm:$0xff]
    %v92 = vld [vmem:[#allocation3 + $0x208] sm:$0xff]
    %v93 = vld [vmem:[#allocation3 + $0x210] sm:$0xff]
    %v94 = vld [vmem:[#allocation3 + $0x218] sm:$0xff]
    %v95 = vld [vmem:[#allocation3 + $0x220] sm:$0xff]
    %v96 = vld [vmem:[#allocation3 + $0x228] sm:$0xff]
    %v97 = vld [vmem:[#allocation3 + $0x230] sm:$0xff]
    %v98 = vld [vmem:[#allocation3 + $0x238] sm:$0xff]
    %v99 = vld [vmem:[#allocation3 + $0x240] sm:$0xff]
    %v100 = vld [vmem:[#allocation3 + $0x248] sm:$0xff]
    %v101 = vld [vmem:[#allocation3 + $0x250] sm:$0xff]
    %v102 = vld [vmem:[#allocation3 + $0x258] sm:$0xff]
    %v103 = vld [vmem:[#allocation3 + $0x260] sm:$0xff]
    %v104 = vld [vmem:[#allocation3 + $0x268] sm:$0xff]
    %v105 = vld [vmem:[#allocation3 + $0x270] sm:$0xff]
    %v106 = vld [vmem:[#allocation3 + $0x278] sm:$0xff]
    %v107 = vld [vmem:[#allocation3 + $0x280] sm:$0xff]
    %v108 = vld [vmem:[#allocation3 + $0x288] sm:$0xff]
    %v109 = vld [vmem:[#allocation3 + $0x290] sm:$0xff]
    %v110 = vld [vmem:[#allocation3 + $0x298] sm:$0xff]
    %v111 = vld [vmem:[#allocation3 + $0x2a0] sm:$0xff]
    %v112 = vld [vmem:[#allocation3 + $0x2a8] sm:$0xff]
    %v113 = vld [vmem:[#allocation3 + $0x2b0] sm:$0xff]
    %v114 = vld [vmem:[#allocation3 + $0x2b8] sm:$0xff]
    %v115 = vld [vmem:[#allocation3 + $0x2c0] sm:$0xff]
    %v116 = vld [vmem:[#allocation3 + $0x2c8] sm:$0xff]
    %v117 = vld [vmem:[#allocation3 + $0x2d0] sm:$0xff]
    %v118 = vld [vmem:[#allocation3 + $0x2d8] sm:$0xff]
    %v119 = vld [vmem:[#allocation3 + $0x2e0] sm:$0xff]
    %v120 = vld [vmem:[#allocation3 + $0x2e8] sm:$0xff]
    %v121 = vld [vmem:[#allocation3 + $0x2f0] sm:$0xff]
    %v122 = vld [vmem:[#allocation3 + $0x2f8] sm:$0xff]
    %s123 = sld [smem:[#allocation2]]
    %v124 = vstv %s123
    %vm125 = vcmp.le.f32.partialorder %v27, %v124
    %vm126 = vcmp.le.f32.partialorder %v28, %v124
    %vm127 = vcmp.le.f32.partialorder %v29, %v124
    %vm128 = vcmp.le.f32.partialorder %v30, %v124
    %vm129 = vcmp.le.f32.partialorder %v31, %v124
    %vm130 = vcmp.le.f32.partialorder %v32, %v124
    %vm131 = vcmp.le.f32.partialorder %v33, %v124
    %vm132 = vcmp.le.f32.partialorder %v34, %v124
    %vm133 = vcmp.le.f32.partialorder %v35, %v124
    %vm134 = vcmp.le.f32.partialorder %v36, %v124
    %vm135 = vcmp.le.f32.partialorder %v37, %v124
    %vm136 = vcmp.le.f32.partialorder %v38, %v124
    %vm137 = vcmp.le.f32.partialorder %v39, %v124
    %vm138 = vcmp.le.f32.partialorder %v40, %v124
    %vm139 = vcmp.le.f32.partialorder %v41, %v124
    %vm140 = vcmp.le.f32.partialorder %v42, %v124
    %vm141 = vcmp.le.f32.partialorder %v43, %v124
    %vm142 = vcmp.le.f32.partialorder %v44, %v124
    %vm143 = vcmp.le.f32.partialorder %v45, %v124
    %vm144 = vcmp.le.f32.partialorder %v46, %v124
    %vm145 = vcmp.le.f32.partialorder %v47, %v124
    %vm146 = vcmp.le.f32.partialorder %v48, %v124
    %vm147 = vcmp.le.f32.partialorder %v49, %v124
    %vm148 = vcmp.le.f32.partialorder %v50, %v124
    %vm149 = vcmp.le.f32.partialorder %v51, %v124
    %vm150 = vcmp.le.f32.partialorder %v52, %v124
    %vm151 = vcmp.le.f32.partialorder %v53, %v124
    %vm152 = vcmp.le.f32.partialorder %v54, %v124
    %vm153 = vcmp.le.f32.partialorder %v55, %v124
    %vm154 = vcmp.le.f32.partialorder %v56, %v124
    %vm155 = vcmp.le.f32.partialorder %v57, %v124
    %vm156 = vcmp.le.f32.partialorder %v58, %v124
    %vm157 = vcmp.le.f32.partialorder %v59, %v124
    %vm158 = vcmp.le.f32.partialorder %v60, %v124
    %vm159 = vcmp.le.f32.partialorder %v61, %v124
    %vm160 = vcmp.le.f32.partialorder %v62, %v124
    %vm161 = vcmp.le.f32.partialorder %v63, %v124
    %vm162 = vcmp.le.f32.partialorder %v64, %v124
    %vm163 = vcmp.le.f32.partialorder %v65, %v124
    %vm164 = vcmp.le.f32.partialorder %v66, %v124
    %vm165 = vcmp.le.f32.partialorder %v67, %v124
    %vm166 = vcmp.le.f32.partialorder %v68, %v124
    %vm167 = vcmp.le.f32.partialorder %v69, %v124
    %vm168 = vcmp.le.f32.partialorder %v70, %v124
    %vm169 = vcmp.le.f32.partialorder %v71, %v124
    %vm170 = vcmp.le.f32.partialorder %v72, %v124
    %vm171 = vcmp.le.f32.partialorder %v73, %v124
    %vm172 = vcmp.le.f32.partialorder %v74, %v124
    %vm173 = vcmp.le.f32.partialorder %v75, %v124
    %vm174 = vcmp.le.f32.partialorder %v76, %v124
    %vm175 = vcmp.le.f32.partialorder %v77, %v124
    %vm176 = vcmp.le.f32.partialorder %v78, %v124
    %vm177 = vcmp.le.f32.partialorder %v79, %v124
    %vm178 = vcmp.le.f32.partialorder %v80, %v124
    %vm179 = vcmp.le.f32.partialorder %v81, %v124
    %vm180 = vcmp.le.f32.partialorder %v82, %v124
    %vm181 = vcmp.le.f32.partialorder %v83, %v124
    %vm182 = vcmp.le.f32.partialorder %v84, %v124
    %vm183 = vcmp.le.f32.partialorder %v85, %v124
    %vm184 = vcmp.le.f32.partialorder %v86, %v124
    %vm185 = vcmp.le.f32.partialorder %v87, %v124
    %vm186 = vcmp.le.f32.partialorder %v88, %v124
    %vm187 = vcmp.le.f32.partialorder %v89, %v124
    %vm188 = vcmp.le.f32.partialorder %v90, %v124
    %vm189 = vcmp.le.f32.partialorder %v91, %v124
    %vm190 = vcmp.le.f32.partialorder %v92, %v124
    %vm191 = vcmp.le.f32.partialorder %v93, %v124
    %vm192 = vcmp.le.f32.partialorder %v94, %v124
    %vm193 = vcmp.le.f32.partialorder %v95, %v124
    %vm194 = vcmp.le.f32.partialorder %v96, %v124
    %vm195 = vcmp.le.f32.partialorder %v97, %v124
    %vm196 = vcmp.le.f32.partialorder %v98, %v124
    %vm197 = vcmp.le.f32.partialorder %v99, %v124
    %vm198 = vcmp.le.f32.partialorder %v100, %v124
    %vm199 = vcmp.le.f32.partialorder %v101, %v124
    %vm200 = vcmp.le.f32.partialorder %v102, %v124
    %vm201 = vcmp.le.f32.partialorder %v103, %v124
    %vm202 = vcmp.le.f32.partialorder %v104, %v124
    %vm203 = vcmp.le.f32.partialorder %v105, %v124
    %vm204 = vcmp.le.f32.partialorder %v106, %v124
    %vm205 = vcmp.le.f32.partialorder %v107, %v124
    %vm206 = vcmp.le.f32.partialorder %v108, %v124
    %vm207 = vcmp.le.f32.partialorder %v109, %v124
    %vm208 = vcmp.le.f32.partialorder %v110, %v124
    %vm209 = vcmp.le.f32.partialorder %v111, %v124
    %vm210 = vcmp.le.f32.partialorder %v112, %v124
    %vm211 = vcmp.le.f32.partialorder %v113, %v124
    %vm212 = vcmp.le.f32.partialorder %v114, %v124
    %vm213 = vcmp.le.f32.partialorder %v115, %v124
    %vm214 = vcmp.le.f32.partialorder %v116, %v124
    %vm215 = vcmp.le.f32.partialorder %v117, %v124
    %vm216 = vcmp.le.f32.partialorder %v118, %v124
    %vm217 = vcmp.le.f32.partialorder %v119, %v124
    %vm218 = vcmp.le.f32.partialorder %v120, %v124
    %vm219 = vcmp.le.f32.partialorder %v121, %v124
    %vm220 = vcmp.le.f32.partialorder %v122, %v124
    %v221 = vsel %vm125, 0.0, %v27
    %v222 = vsel %vm126, 0.0, %v28
    %v223 = vsel %vm127, 0.0, %v29
    %v224 = vsel %vm128, 0.0, %v30
    %v225 = vsel %vm129, 0.0, %v31
    %v226 = vsel %vm130, 0.0, %v32
    %v227 = vsel %vm131, 0.0, %v33
    %v228 = vsel %vm132, 0.0, %v34
    %v229 = vsel %vm133, 0.0, %v35
    %v230 = vsel %vm134, 0.0, %v36
    %v231 = vsel %vm135, 0.0, %v37
    %v232 = vsel %vm136, 0.0, %v38
    %v233 = vsel %vm137, 0.0, %v39
    %v234 = vsel %vm138, 0.0, %v40
    %v235 = vsel %vm139, 0.0, %v41
    %v236 = vsel %vm140, 0.0, %v42
    %v237 = vsel %vm141, 0.0, %v43
    %v238 = vsel %vm142, 0.0, %v44
    %v239 = vsel %vm143, 0.0, %v45
    %v240 = vsel %vm144, 0.0, %v46
    %v241 = vsel %vm145, 0.0, %v47
    %v242 = vsel %vm146, 0.0, %v48
    %v243 = vsel %vm147, 0.0, %v49
    %v244 = vsel %vm148, 0.0, %v50
    %v245 = vsel %vm149, 0.0, %v51
    %v246 = vsel %vm150, 0.0, %v52
    %v247 = vsel %vm151, 0.0, %v53
    %v248 = vsel %vm152, 0.0, %v54
    %v249 = vsel %vm153, 0.0, %v55
    %v250 = vsel %vm154, 0.0, %v56
    %v251 = vsel %vm155, 0.0, %v57
    %v252 = vsel %vm156, 0.0, %v58
    %v253 = vsel %vm157, 0.0, %v59
    %v254 = vsel %vm158, 0.0, %v60
    %v255 = vsel %vm159, 0.0, %v61
    %v256 = vsel %vm160, 0.0, %v62
    %v257 = vsel %vm161, 0.0, %v63
    %v258 = vsel %vm162, 0.0, %v64
    %v259 = vsel %vm163, 0.0, %v65
    %v260 = vsel %vm164, 0.0, %v66
    %v261 = vsel %vm165, 0.0, %v67
    %v262 = vsel %vm166, 0.0, %v68
    %v263 = vsel %vm167, 0.0, %v69
    %v264 = vsel %vm168, 0.0, %v70
    %v265 = vsel %vm169, 0.0, %v71
    %v266 = vsel %vm170, 0.0, %v72
    %v267 = vsel %vm171, 0.0, %v73
    %v268 = vsel %vm172, 0.0, %v74
    %v269 = vsel %vm173, 0.0, %v75
    %v270 = vsel %vm174, 0.0, %v76
    %v271 = vsel %vm175, 0.0, %v77
    %v272 = vsel %vm176, 0.0, %v78
    %v273 = vsel %vm177, 0.0, %v79
    %v274 = vsel %vm178, 0.0, %v80
    %v275 = vsel %vm179, 0.0, %v81
    %v276 = vsel %vm180, 0.0, %v82
    %v277 = vsel %vm181, 0.0, %v83
    %v278 = vsel %vm182, 0.0, %v84
    %v279 = vsel %vm183, 0.0, %v85
    %v280 = vsel %vm184, 0.0, %v86
    %v281 = vsel %vm185, 0.0, %v87
    %v282 = vsel %vm186, 0.0, %v88
    %v283 = vsel %vm187, 0.0, %v89
    %v284 = vsel %vm188, 0.0, %v90
    %v285 = vsel %vm189, 0.0, %v91
    %v286 = vsel %vm190, 0.0, %v92
    %v287 = vsel %vm191, 0.0, %v93
    %v288 = vsel %vm192, 0.0, %v94
    %v289 = vsel %vm193, 0.0, %v95
    %v290 = vsel %vm194, 0.0, %v96
    %v291 = vsel %vm195, 0.0, %v97
    %v292 = vsel %vm196, 0.0, %v98
    %v293 = vsel %vm197, 0.0, %v99
    %v294 = vsel %vm198, 0.0, %v100
    %v295 = vsel %vm199, 0.0, %v101
    %v296 = vsel %vm200, 0.0, %v102
    %v297 = vsel %vm201, 0.0, %v103
    %v298 = vsel %vm202, 0.0, %v104
    %v299 = vsel %vm203, 0.0, %v105
    %v300 = vsel %vm204, 0.0, %v106
    %v301 = vsel %vm205, 0.0, %v107
    %v302 = vsel %vm206, 0.0, %v108
    %v303 = vsel %vm207, 0.0, %v109
    %v304 = vsel %vm208, 0.0, %v110
    %v305 = vsel %vm209, 0.0, %v111
    %v306 = vsel %vm210, 0.0, %v112
    %v307 = vsel %vm211, 0.0, %v113
    %v308 = vsel %vm212, 0.0, %v114
    %v309 = vsel %vm213, 0.0, %v115
    %v310 = vsel %vm214, 0.0, %v116
    %v311 = vsel %vm215, 0.0, %v117
    %v312 = vsel %vm216, 0.0, %v118
    %v313 = vsel %vm217, 0.0, %v119
    %v314 = vsel %vm218, 0.0, %v120
    %v315 = vsel %vm219, 0.0, %v121
    %v316 = vsel %vm220, 0.0, %v122
    %317 = vst [vmem:[#allocation6] sm:$0xff] %v221
    %318 = vst [vmem:[#allocation6 + $0x8] sm:$0xff] %v222
    %319 = vst [vmem:[#allocation6 + $0x10] sm:$0xff] %v223
    %320 = vst [vmem:[#allocation6 + $0x18] sm:$0xff] %v224
    %321 = vst [vmem:[#allocation6 + $0x20] sm:$0xff] %v225
    %322 = vst [vmem:[#allocation6 + $0x28] sm:$0xff] %v226
    %323 = vst [vmem:[#allocation6 + $0x30] sm:$0xff] %v227
    %324 = vst [vmem:[#allocation6 + $0x38] sm:$0xff] %v228
    %325 = vst [vmem:[#allocation6 + $0x40] sm:$0xff] %v229
    %326 = vst [vmem:[#allocation6 + $0x48] sm:$0xff] %v230
    %327 = vst [vmem:[#allocation6 + $0x50] sm:$0xff] %v231
    %328 = vst [vmem:[#allocation6 + $0x58] sm:$0xff] %v232
    %329 = vst [vmem:[#allocation6 + $0x60] sm:$0xff] %v233
    %330 = vst [vmem:[#allocation6 + $0x68] sm:$0xff] %v234
    %331 = vst [vmem:[#allocation6 + $0x70] sm:$0xff] %v235
    %332 = vst [vmem:[#allocation6 + $0x78] sm:$0xff] %v236
    %333 = vst [vmem:[#allocation6 + $0x80] sm:$0xff] %v237
    %334 = vst [vmem:[#allocation6 + $0x88] sm:$0xff] %v238
    %335 = vst [vmem:[#allocation6 + $0x90] sm:$0xff] %v239
    %336 = vst [vmem:[#allocation6 + $0x98] sm:$0xff] %v240
    %337 = vst [vmem:[#allocation6 + $0xa0] sm:$0xff] %v241
    %338 = vst [vmem:[#allocation6 + $0xa8] sm:$0xff] %v242
    %339 = vst [vmem:[#allocation6 + $0xb0] sm:$0xff] %v243
    %340 = vst [vmem:[#allocation6 + $0xb8] sm:$0xff] %v244
    %341 = vst [vmem:[#allocation6 + $0xc0] sm:$0xff] %v245
    %342 = vst [vmem:[#allocation6 + $0xc8] sm:$0xff] %v246
    %343 = vst [vmem:[#allocation6 + $0xd0] sm:$0xff] %v247
    %344 = vst [vmem:[#allocation6 + $0xd8] sm:$0xff] %v248
    %345 = vst [vmem:[#allocation6 + $0xe0] sm:$0xff] %v249
    %346 = vst [vmem:[#allocation6 + $0xe8] sm:$0xff] %v250
    %347 = vst [vmem:[#allocation6 + $0xf0] sm:$0xff] %v251
    %348 = vst [vmem:[#allocation6 + $0xf8] sm:$0xff] %v252
    %349 = vst [vmem:[#allocation6 + $0x100] sm:$0xff] %v253
    %350 = vst [vmem:[#allocation6 + $0x108] sm:$0xff] %v254
    %351 = vst [vmem:[#allocation6 + $0x110] sm:$0xff] %v255
    %352 = vst [vmem:[#allocation6 + $0x118] sm:$0xff] %v256
    %353 = vst [vmem:[#allocation6 + $0x120] sm:$0xff] %v257
    %354 = vst [vmem:[#allocation6 + $0x128] sm:$0xff] %v258
    %355 = vst [vmem:[#allocation6 + $0x130] sm:$0xff] %v259
    %356 = vst [vmem:[#allocation6 + $0x138] sm:$0xff] %v260
    %357 = vst [vmem:[#allocation6 + $0x140] sm:$0xff] %v261
    %358 = vst [vmem:[#allocation6 + $0x148] sm:$0xff] %v262
    %359 = vst [vmem:[#allocation6 + $0x150] sm:$0xff] %v263
    %360 = vst [vmem:[#allocation6 + $0x158] sm:$0xff] %v264
    %361 = vst [vmem:[#allocation6 + $0x160] sm:$0xff] %v265
    %362 = vst [vmem:[#allocation6 + $0x168] sm:$0xff] %v266
    %363 = vst [vmem:[#allocation6 + $0x170] sm:$0xff] %v267
    %364 = vst [vmem:[#allocation6 + $0x178] sm:$0xff] %v268
    %365 = vst [vmem:[#allocation6 + $0x180] sm:$0xff] %v269
    %366 = vst [vmem:[#allocation6 + $0x188] sm:$0xff] %v270
    %367 = vst [vmem:[#allocation6 + $0x190] sm:$0xff] %v271
    %368 = vst [vmem:[#allocation6 + $0x198] sm:$0xff] %v272
    %369 = vst [vmem:[#allocation6 + $0x1a0] sm:$0xff] %v273
    %370 = vst [vmem:[#allocation6 + $0x1a8] sm:$0xff] %v274
    %371 = vst [vmem:[#allocation6 + $0x1b0] sm:$0xff] %v275
    %372 = vst [vmem:[#allocation6 + $0x1b8] sm:$0xff] %v276
    %373 = vst [vmem:[#allocation6 + $0x1c0] sm:$0xff] %v277
    %374 = vst [vmem:[#allocation6 + $0x1c8] sm:$0xff] %v278
    %375 = vst [vmem:[#allocation6 + $0x1d0] sm:$0xff] %v279
    %376 = vst [vmem:[#allocation6 + $0x1d8] sm:$0xff] %v280
    %377 = vst [vmem:[#allocation6 + $0x1e0] sm:$0xff] %v281
    %378 = vst [vmem:[#allocation6 + $0x1e8] sm:$0xff] %v282
    %379 = vst [vmem:[#allocation6 + $0x1f0] sm:$0xff] %v283
    %380 = vst [vmem:[#allocation6 + $0x1f8] sm:$0xff] %v284
    %381 = vst [vmem:[#allocation6 + $0x200] sm:$0xff] %v285
    %382 = vst [vmem:[#allocation6 + $0x208] sm:$0xff] %v286
    %383 = vst [vmem:[#allocation6 + $0x210] sm:$0xff] %v287
    %384 = vst [vmem:[#allocation6 + $0x218] sm:$0xff] %v288
    %385 = vst [vmem:[#allocation6 + $0x220] sm:$0xff] %v289
    %386 = vst [vmem:[#allocation6 + $0x228] sm:$0xff] %v290
    %387 = vst [vmem:[#allocation6 + $0x230] sm:$0xff] %v291
    %388 = vst [vmem:[#allocation6 + $0x238] sm:$0xff] %v292
    %389 = vst [vmem:[#allocation6 + $0x240] sm:$0xff] %v293
    %390 = vst [vmem:[#allocation6 + $0x248] sm:$0xff] %v294
    %391 = vst [vmem:[#allocation6 + $0x250] sm:$0xff] %v295
    %392 = vst [vmem:[#allocation6 + $0x258] sm:$0xff] %v296
    %393 = vst [vmem:[#allocation6 + $0x260] sm:$0xff] %v297
    %394 = vst [vmem:[#allocation6 + $0x268] sm:$0xff] %v298
    %395 = vst [vmem:[#allocation6 + $0x270] sm:$0xff] %v299
    %396 = vst [vmem:[#allocation6 + $0x278] sm:$0xff] %v300
    %397 = vst [vmem:[#allocation6 + $0x280] sm:$0xff] %v301
    %398 = vst [vmem:[#allocation6 + $0x288] sm:$0xff] %v302
    %399 = vst [vmem:[#allocation6 + $0x290] sm:$0xff] %v303
    %400 = vst [vmem:[#allocation6 + $0x298] sm:$0xff] %v304
    %401 = vst [vmem:[#allocation6 + $0x2a0] sm:$0xff] %v305
    %402 = vst [vmem:[#allocation6 + $0x2a8] sm:$0xff] %v306
    %403 = vst [vmem:[#allocation6 + $0x2b0] sm:$0xff] %v307
    %404 = vst [vmem:[#allocation6 + $0x2b8] sm:$0xff] %v308
    %405 = vst [vmem:[#allocation6 + $0x2c0] sm:$0xff] %v309
    %406 = vst [vmem:[#allocation6 + $0x2c8] sm:$0xff] %v310
    %407 = vst [vmem:[#allocation6 + $0x2d0] sm:$0xff] %v311
    %408 = vst [vmem:[#allocation6 + $0x2d8] sm:$0xff] %v312
    %409 = vst [vmem:[#allocation6 + $0x2e0] sm:$0xff] %v313
    %410 = vst [vmem:[#allocation6 + $0x2e8] sm:$0xff] %v314
    %411 = vst [vmem:[#allocation6 + $0x2f0] sm:$0xff] %v315
    %412 = vst [vmem:[#allocation6 + $0x2f8] sm:$0xff] %v316
    // Predicated region
    $region14: #{tpu_custom_call.1} parent=1 // pred_check
      _
    $region15: #{tpu_custom_call.1} parent=1 // pred_check_branch
      %414 = sbr.rel (0) target = $region17
    $region16: #{tpu_custom_call.1} parent=1 // pred_region
      %s416 = ssub.s32 12288, 12288
      %417 = vsyncadd [#allocation5], %s416
      %s418 = sshll.u32 [#allocation6], 4
      %s419 = int_to_ptr.vmem [resolvable:$true] %s418
      %424 = dma.vmem_to_hbm [thread:$0]  %s419, 12288, %s2, [#allocation5], 2048, 2048, 128
    $region17: #{tpu_custom_call.1} parent=1 // pred_fallthru
      _
    // Predicated region
    $region18: #{tpu_custom_call.1} parent=1 // pred_check
      _
    $region19: #{tpu_custom_call.1} parent=1 // pred_check_branch
      %426 = sbr.rel (0) target = $region21
    $region20: #{tpu_custom_call.1} parent=1 // pred_region
      %427 = dma.done [#allocation5], 12288
    $region21: #{tpu_custom_call.1} parent=1 // pred_fallthru
      _
    %428 = vsyncpa [#allocation4], 1
    %429 = vsyncpa [#allocation5], 1

</llo_original>
